<compile_context>
chip_gen: v7x
topology: tpu7x:2x2x1
jax: 0.10.0
libtpu: 0.0.40
codegen_flags: <defaults>
</compile_context>

<pallas_src>
import jax
import jax.numpy as jnp
from jax.experimental import pallas as pl
from jax.experimental.pallas import tpu as pltpu

BN_EPS = 1e-5
LEAKY_SLOPE = 0.01


def _round_up(x, m):
    return (x + m - 1) // m * m


def _vmem_limit_bytes():
    """Per-generation VMEM budget with headroom (v7x: 64 MiB/TC; v5e/v6e: 128 MiB)."""
    try:
        cap = int(pltpu.get_tpu_info().vmem_capacity_bytes)
    except Exception:
        cap = 64 * 1024 * 1024
    return min(cap * 3 // 4, 96 * 1024 * 1024)


# --------------------------------------------------------------------------
# Pass 1: per-tile partial batch statistics of d = x @ W1^T
# --------------------------------------------------------------------------
def stats_kernel(x_ref, w1_ref, sum_ref, sq_ref):
    # Bias-free: the Linear1 bias is shift-invariant under BatchNorm and
    # cancels analytically.  Padded (all-zero) batch rows therefore contribute
    # exactly 0 to both sums -> no per-tile row masking needed, and the sums
    # are effectively "shifted" by b1, which reduces E[d^2]-E[d]^2 cancellation.
    d = jnp.dot(x_ref[...], w1_ref[...], preferred_element_type=jnp.float32)
    sum_ref[...] = jnp.sum(d, axis=0, keepdims=True)[None]        # (1,1,Hp)
    sq_ref[...] = jnp.sum(d * d, axis=0, keepdims=True)[None]     # (1,1,Hp)


# --------------------------------------------------------------------------
# Pass 2: recompute d, folded BN affine + LeakyReLU + Linear2
# --------------------------------------------------------------------------
def fused_mlp_kernel(x_ref, w1_ref, scale_ref, shift_ref, w2_ref, b2_ref, o_ref):
    # Recompute d = x @ W1^T instead of re-reading an f32 h from HBM.
    d = jnp.dot(x_ref[...], w1_ref[...], preferred_element_type=jnp.float32)
    # Folded BatchNorm: a = d * (gamma*inv_std) + (beta - mean_d*gamma*inv_std).
    a = d * scale_ref[...] + shift_ref[...]
    a = jnp.where(a >= 0, a, LEAKY_SLOPE * a)                      # LeakyReLU(0.01)
    # TODO(synk): dropout with p>0 (training) would need pltpu.prng_seed +
    # pltpu.prng_random_bits; module default p=0.0 is identity.
    out = jnp.dot(a.astype(w2_ref.dtype), w2_ref[...],
                  preferred_element_type=jnp.float32)
    o_ref[...] = (out + b2_ref[...]).astype(o_ref.dtype)


# --------------------------------------------------------------------------
# Parameter preparation (done ONCE, not per forward call)
# --------------------------------------------------------------------------
def prepare_params(params, matmul_dtype=jnp.bfloat16):
    """Transpose, zero-pad feature dims to multiples of 128 and cast weights.

    Note: gamma/beta MUST be zero-padded.  Padded hidden features have d = 0
    and var = 0, so inv_std = rsqrt(eps) is large; gamma = 0 forces their
    BN scale to exactly 0 and keeps them inert through LeakyReLU and Linear2.
    The Linear1 bias b1 cancels analytically under training-mode BatchNorm,
    so it is not needed by the kernels at all.
    """
    w1 = params["w1"]
    w2, b2 = params["w2"], params["b2"]
    gamma, beta = params["gamma"], params["beta"]

    hid, din = w1.shape
    dout = w2.shape[0]
    dinp, hp, doutp = _round_up(din, 128), _round_up(hid, 128), _round_up(dout, 128)
    # TODO(synk): for very large H/Dout on v7x, pad to 256 and add a grid axis
    # over Hp/Doutp so W1/W2 are tiled instead of fully VMEM-resident.

    w1_t = jnp.zeros((dinp, hp), matmul_dtype).at[:din, :hid].set(
        w1.T.astype(matmul_dtype))
    w2_t = jnp.zeros((hp, doutp), matmul_dtype).at[:hid, :dout].set(
        w2.T.astype(matmul_dtype))
    b2_p = jnp.zeros((1, doutp), jnp.float32).at[:, :dout].set(b2)
    gamma_p = jnp.zeros((hp,), jnp.float32).at[:hid].set(gamma)
    beta_p = jnp.zeros((hp,), jnp.float32).at[:hid].set(beta)

    return dict(w1_t=w1_t, w2_t=w2_t, b2=b2_p, gamma=gamma_p, beta=beta_p,
                din=din, hid=hid, dout=dout,
                dinp=dinp, hp=hp, doutp=doutp,
                matmul_dtype=matmul_dtype)


# --------------------------------------------------------------------------
# Forward
# --------------------------------------------------------------------------
def mlp_forward(x, pp, *, tile_n=512):
    """x: [N, input_dim] float32. pp: output of prepare_params()."""
    n, din = x.shape
    dinp, hp, doutp = pp["dinp"], pp["hp"], pp["doutp"]
    mdt = pp["matmul_dtype"]
    vmem_limit = _vmem_limit_bytes()

    # Batch tiling: tile rows a multiple of 16 (bf16 sublane packing).
    tile_n = max(16, _round_up(min(tile_n, _round_up(n, 16)), 16))
    n_pad = _round_up(n, tile_n)
    num_tiles = n_pad // tile_n

    # bf16 x, zero-padded; shared by both passes.
    x_p = jnp.zeros((n_pad, dinp), mdt).at[:n, :din].set(x.astype(mdt))

    # ---- Pass 1: per-tile partial sums / sum-of-squares of d = x @ W1^T ----
    # Per-tile outputs (no carried accumulator) -> "parallel" axis (megacore).
    psum, psq = pl.pallas_call(
        stats_kernel,
        out_shape=(jax.ShapeDtypeStruct((num_tiles, 1, hp), jnp.float32),
                   jax.ShapeDtypeStruct((num_tiles, 1, hp), jnp.float32)),
        grid_spec=pltpu.PrefetchScalarGridSpec(
            num_scalar_prefetch=0,
            grid=(num_tiles,),
            in_specs=[
                pl.BlockSpec((tile_n, dinp), lambda i: (i, 0)),   # x tile
                pl.BlockSpec((dinp, hp), lambda i: (0, 0)),       # W1 resident
            ],
            out_specs=(
                pl.BlockSpec((1, 1, hp), lambda i: (i, 0, 0)),    # partial sum
                pl.BlockSpec((1, 1, hp), lambda i: (i, 0, 0)),    # partial sumsq
            )),
        compiler_params=pltpu.CompilerParams(
            dimension_semantics=("parallel",),
            vmem_limit_bytes=vmem_limit),
    )(x_p, pp["w1_t"])

    # ---- Fold BN into per-feature scale/shift (tiny [Hp] vectors) ----------
    # h = d + b1, and BN(h) = (d - mean_d) * inv_std * gamma + beta  (b1 cancels).
    sum_d = jnp.sum(psum[:, 0, :], axis=0)
    sq_d = jnp.sum(psq[:, 0, :], axis=0)
    mean_d = sum_d / n
    var = jnp.maximum(sq_d / n - mean_d * mean_d, 0.0)   # biased var (training BN)
    inv = jax.lax.rsqrt(var + BN_EPS)
    scale = (pp["gamma"] * inv)[None, :]                              # [1, Hp]
    shift = (pp["beta"] - mean_d * pp["gamma"] * inv)[None, :]        # [1, Hp]
    # TODO(synk): PyTorch BN also updates running_mean/running_var in training;
    # that state update does not affect the forward output and is omitted.

    # ---- Pass 2: recompute d, BN affine + LeakyReLU + Linear2 --------------
    # Note: the constant-index blocks (W1, W2, scale, shift, b2) could be
    # single-buffered (pipeline_mode=pl.Buffered(1)) to free VMEM for large H.
    out = pl.pallas_call(
        fused_mlp_kernel,
        out_shape=jax.ShapeDtypeStruct((n_pad, doutp), jnp.float32),
        grid_spec=pltpu.PrefetchScalarGridSpec(
            num_scalar_prefetch=0,
            grid=(num_tiles,),
            in_specs=[
                pl.BlockSpec((tile_n, dinp), lambda i: (i, 0)),   # x tile
                pl.BlockSpec((dinp, hp), lambda i: (0, 0)),       # W1 resident
                pl.BlockSpec((1, hp), lambda i: (0, 0)),          # scale
                pl.BlockSpec((1, hp), lambda i: (0, 0)),          # shift
                pl.BlockSpec((hp, doutp), lambda i: (0, 0)),      # W2 resident
                pl.BlockSpec((1, doutp), lambda i: (0, 0)),       # b2 resident
            ],
            out_specs=pl.BlockSpec((tile_n, doutp), lambda i: (i, 0))),
        compiler_params=pltpu.CompilerParams(
            dimension_semantics=("parallel",),   # independent tiles -> megacore
            vmem_limit_bytes=vmem_limit),
    )(x_p, pp["w1_t"], scale, shift, pp["w2_t"], pp["b2"])

    return out[:n, :pp["dout"]]


# --------------------------------------------------------------------------
# Parameters & reference
# --------------------------------------------------------------------------
def init_params(key, input_dim, hidden_dim, output_dim):
    """Deterministic synthetic parameters matching the nn.Module shapes."""
    k1, k2, k3, k4 = jax.random.split(key, 4)
    return {
        "w1": jax.random.normal(k1, (hidden_dim, input_dim), jnp.float32) * 0.1,
        "b1": jax.random.normal(k2, (hidden_dim,), jnp.float32) * 0.1,
        "gamma": jnp.ones((hidden_dim,), jnp.float32),
        "beta": jnp.zeros((hidden_dim,), jnp.float32),
        "w2": jax.random.normal(k3, (output_dim, hidden_dim), jnp.float32) * 0.1,
        "b2": jax.random.normal(k4, (output_dim,), jnp.float32) * 0.1,
    }


def mlp_reference(x, params):
    """Pure-JAX f32 reference for verification."""
    h = x @ params["w1"].T + params["b1"]
    mean = jnp.mean(h, axis=0, keepdims=True)
    var = jnp.mean((h - mean) ** 2, axis=0, keepdims=True)
    h = (h - mean) / jnp.sqrt(var + BN_EPS)
    h = h * params["gamma"] + params["beta"]
    h = jnp.where(h >= 0, h, LEAKY_SLOPE * h)
    return h @ params["w2"].T + params["b2"]


if __name__ == "__main__":
    # Small, deliberately non-128-aligned shapes to exercise padding, batch
    # tiling (4 tiles) and the padded-last-tile path.  (tile_n=64 is only for
    # exercising that path; real workloads should use the 512-row default.)
    batch, input_dim, hidden_dim, output_dim = 200, 48, 96, 24

    key = jax.random.PRNGKey(0)
    kx, kp = jax.random.split(key)
    x = jax.random.normal(kx, (batch, input_dim), jnp.float32)
    params = init_params(kp, input_dim, hidden_dim, output_dim)

    prepared = prepare_params(params)          # transpose/pad/cast ONCE
    out = mlp_forward(x, prepared, tile_n=64)
    jax.block_until_ready(out)

    ref = mlp_reference(x, params)
    assert out.shape == (batch, output_dim)
    # bf16 MXU operands with f32 accumulation -> small numeric drift vs f32 ref.
    assert jnp.allclose(out, ref, atol=3e-2, rtol=3e-2), "mismatch vs reference"

    print("KERNEL_OK")
</pallas_src>

<mosaic_0001>
module attributes {stable_mosaic.version = 11 : i64} {
  func.func @stats_kernel(%arg0: i32, %arg1: memref<64x128xbf16, #tpu.memory_space<vmem>>, %arg2: memref<128x128xbf16, #tpu.memory_space<vmem>>, %arg3: memref<1x1x128xf32, #tpu.memory_space<vmem>>, %arg4: memref<1x1x128xf32, #tpu.memory_space<vmem>>) attributes {dimension_semantics = [#tpu.dimension_semantics<parallel>], iteration_bounds = array<i64: 4>, scalar_prefetch = 0 : i64, scratch_operands = 0 : i64, tpu.core_type = #tpu.core_type<tc>, window_params = [{transform_indices = @transform_0, window_bounds = array<i64: 64, 128>}, {pipeline_mode = #tpu.pipeline_mode<synchronous>, transform_indices = @transform_1, window_bounds = array<i64: 128, 128>}, {transform_indices = @transform_2, window_bounds = array<i64: 1, 1, 128>}, {transform_indices = @transform_3, window_bounds = array<i64: 1, 1, 128>}]} {
    %c0 = arith.constant 0 : index
    %c0_0 = arith.constant 0 : index
    %0 = vector.load %arg1[%c0, %c0_0] : memref<64x128xbf16, #tpu.memory_space<vmem>>, vector<64x128xbf16>
    %c0_1 = arith.constant 0 : index
    %c0_2 = arith.constant 0 : index
    %1 = vector.load %arg2[%c0_1, %c0_2] : memref<128x128xbf16, #tpu.memory_space<vmem>>, vector<128x128xbf16>
    %cst = arith.constant dense<0.000000e+00> : vector<64x128xf32>
    %2 = tpu.matmul %0, %1, %cst {dimension_numbers = #tpu.dot_dimension_numbers<[1], [0], [0], [1], [0, 0, 1, 1], [], []>} : vector<64x128xbf16>, vector<128x128xbf16>, vector<64x128xf32> -> vector<64x128xf32>
    %cst_3 = arith.constant dense<0.000000e+00> : vector<128xf32>
    %3 = vector.multi_reduction <add>, %2, %cst_3 [0] : vector<64x128xf32> to vector<128xf32>
    %4 = vector.shape_cast %3 : vector<128xf32> to vector<1x128xf32>
    %5 = vector.shape_cast %4 : vector<1x128xf32> to vector<1x1x128xf32>
    %c0_4 = arith.constant 0 : index
    %c0_5 = arith.constant 0 : index
    %c0_6 = arith.constant 0 : index
    %6 = vector.load %arg3[%c0_4, %c0_5, %c0_6] : memref<1x1x128xf32, #tpu.memory_space<vmem>>, vector<1x1x128xf32>
    tpu.vector_store %arg3[%c0_4, %c0_5, %c0_6], %5 {strides = array<i32>} : memref<1x1x128xf32, #tpu.memory_space<vmem>>, vector<1x1x128xf32>,
    %7 = arith.mulf %2, %2 : vector<64x128xf32>
    %cst_7 = arith.constant dense<0.000000e+00> : vector<128xf32>
    %8 = vector.multi_reduction <add>, %7, %cst_7 [0] : vector<64x128xf32> to vector<128xf32>
    %9 = vector.shape_cast %8 : vector<128xf32> to vector<1x128xf32>
    %10 = vector.shape_cast %9 : vector<1x128xf32> to vector<1x1x128xf32>
    %c0_8 = arith.constant 0 : index
    %c0_9 = arith.constant 0 : index
    %c0_10 = arith.constant 0 : index
    %11 = vector.load %arg4[%c0_8, %c0_9, %c0_10] : memref<1x1x128xf32, #tpu.memory_space<vmem>>, vector<1x1x128xf32>
    tpu.vector_store %arg4[%c0_8, %c0_9, %c0_10], %10 {strides = array<i32>} : memref<1x1x128xf32, #tpu.memory_space<vmem>>, vector<1x1x128xf32>,
    return
  }
  func.func @transform_0(%arg0: i32) -> (i32, i32) {
    %c0_i32 = arith.constant 0 : i32
    %c0_i32_0 = arith.constant 0 : i32
    return %arg0, %c0_i32 : i32, i32
  }
  func.func @transform_1(%arg0: i32) -> (i32, i32) {
    %c0_i32 = arith.constant 0 : i32
    %c0_i32_0 = arith.constant 0 : i32
    %c0_i32_1 = arith.constant 0 : i32
    return %c0_i32, %c0_i32_0 : i32, i32
  }
  func.func @transform_2(%arg0: i32) -> (i32, i32, i32) {
    %c0_i32 = arith.constant 0 : i32
    %c0_i32_0 = arith.constant 0 : i32
    %c0_i32_1 = arith.constant 0 : i32
    return %arg0, %c0_i32, %c0_i32_0 : i32, i32, i32
  }
  func.func @transform_3(%arg0: i32) -> (i32, i32, i32) {
    %c0_i32 = arith.constant 0 : i32
    %c0_i32_0 = arith.constant 0 : i32
    %c0_i32_1 = arith.constant 0 : i32
    return %arg0, %c0_i32, %c0_i32_0 : i32, i32, i32
  }
}

</mosaic_0001>

<llo_original>
// kernel: tpu_custom_call.1
$region0: #{tpu_custom_call.1}
  #allocation0 [shape = 'u32[]', space=smem, size = 0x4, offset = 0x4, fixed_abs, tag = 'smem constant byte address 0x4 - core index']
  #allocation1 [shape = 'u32[144,128]{1,0:T(1,128)}', space=vmem, size = 0x12000, scoped, tag = 'internal scratch']
  %s0 = inlined_call_operand.hbm [shape: bf16[256,128], index: 0, kind: input, shape index: {}]
  %s1 = inlined_call_operand.hbm [shape: bf16[128,128], index: 1, kind: input, shape index: {}]
  %s2 = inlined_call_operand.hbm [shape: f32[4,1,128], index: 2, kind: output, shape index: {0}]
  %s3 = inlined_call_operand.hbm [shape: f32[4,1,128], index: 3, kind: output, shape index: {1}]
  %4 = xla_tuple %s2, %s3
  %s5 = sld [smem:[#allocation0]]
  $region57: #{tpu_custom_call.1} parent=0
    _
  %s7 = ssub.s32 1, %s5
  %s8 = scalar_select 0, %s7, %s5
  $region1: #{tpu_custom_call.1} parent=0
    #allocation2 [shape = 'u8[32768]{0}', space=vmem, size = 0x8000, scoped, tag = 'input window, operand 0']
    #allocation3 [shape = 's32[2]{0}', space=sflag, size = 0x8, scoped, tag = 'scoped memory for tpu_custom_call.1']
    #allocation4 [shape = 's32[2]{0}', space=sflag, size = 0x8, scoped, tag = 'scoped memory for tpu_custom_call.1']
    #allocation5 [shape = 'u8[32768]{0}', space=vmem, size = 0x8000, scoped, tag = 'input window, operand 1, single buffered']
    #allocation6 [shape = 's32[1]{0}', space=sflag, size = 0x4, scoped, tag = 'scoped memory for tpu_custom_call.1']
    #allocation7 [shape = 'u8[1024]{0}', space=vmem, size = 0x400, scoped, tag = 'output window, operand 0']
    #allocation8 [shape = 'u8[1024]{0}', space=vmem, size = 0x400, scoped, tag = 'output window, operand 1']
    #allocation9 [shape = 's32[2]{0}', space=sflag, size = 0x8, scoped, tag = 'scoped memory for tpu_custom_call.1']
    %9 = vsyncpa [#allocation3], 0
    %s10 = scalar_lea.sflag [#allocation3], 1
    %11 = vsyncpa %s10, 0
    %12 = vsyncpa [#allocation6], 0
    %13 = vsyncpa [#allocation4], 0
    %s14 = scalar_lea.sflag [#allocation4], 1
    %15 = vsyncpa %s14, 0
    %16 = vsyncpa [#allocation9], 0
    %s17 = scalar_lea.sflag [#allocation9], 1
    %18 = vsyncpa %s17, 0
    loop: start=0, step=1, limit=6
    $region2: #{tpu_custom_call.1} parent=1 // loop_pre_header
      _
    $region3: #{tpu_custom_call.1} parent=1 // loop_header
      %s20 = sphi 0, %s24
      %p21 = scmp.ge.s32.totalorder %s20, 6
      %s30 = sphi 0, %s32
      %s33 = sphi 0, %s30
      %s34 = sphi 0, %s33
      %s50 = sphi 0, %s34
      %s54 = sphi 0, %s54
      %s56 = sphi 0, %s54
      %s57 = sphi 0, %s56
      %s71 = sphi 0, %s57
      %s77 = sphi 0, %s79
      %s80 = sphi 0, %s77
      %s81 = sphi 0, %s80
      %s97 = sphi 0, %s81
      %s103 = sphi 0, %s105
      %s106 = sphi 0, %s103
      %s107 = sphi 0, %s106
      %s123 = sphi 0, %s107
    $region4: #{tpu_custom_call.1} parent=1 // loop_header_branch
      %23 = sbr.rel (%p21) target = $region8
    $region5: #{tpu_custom_call.1} parent=1 // loop_body
      %s25 = ssub.s32 %s20, 1
      %s26 = ssub.s32 %s20, 2
      %s27 = sadd.s32 %s20, 1
      %s28 = ssub.s32 %s20, %s27
      %p29 = scmp.eq.s32.totalorder %s28, 0
      %s31 = sadd.s32 %s30, 1
      %s32 = scalar_select %p29, %s30, %s31
      %p35 = pneg %p29
      %p36 = scmp.eq.s32.totalorder %s20, 3
      %p37 = por %p35, %p36
      %p38 = scmp.ne.s32.totalorder %s30, %s33
      %p39 = scmp.eq.s32.totalorder %s20, 0
      %p40 = por %p38, %p39
      %p41 = scmp.ne.s32.totalorder %s30, %s33
      %p42 = scmp.eq.s32.totalorder %s25, 3
      %p43 = por %p41, %p42
      %p44 = scmp.ne.s32.totalorder %s33, %s34
      %p45 = scmp.eq.s32.totalorder %s25, 0
      %p46 = por %p44, %p45
      %p47 = scmp.ne.s32.totalorder %s33, %s34
      %p48 = scmp.eq.s32.totalorder %s26, 3
      %p49 = por %p47, %p48
      %p51 = scmp.ne.s32.totalorder %s34, %s50
      %p52 = scmp.eq.s32.totalorder %s26, 0
      %p53 = por %p51, %p52
      %s55 = sadd.s32 %s54, 1
      %p58 = scmp.eq.s32.totalorder %s20, 3
      %p59 = scmp.ne.s32.totalorder %s54, %s56
      %p60 = scmp.eq.s32.totalorder %s20, 0
      %p61 = por %p59, %p60
      %p62 = scmp.ne.s32.totalorder %s54, %s56
      %p63 = scmp.eq.s32.totalorder %s25, 3
      %p64 = por %p62, %p63
      %p65 = scmp.ne.s32.totalorder %s56, %s57
      %p66 = scmp.eq.s32.totalorder %s25, 0
      %p67 = por %p65, %p66
      %p68 = scmp.ne.s32.totalorder %s56, %s57
      %p69 = scmp.eq.s32.totalorder %s26, 3
      %p70 = por %p68, %p69
      %p72 = scmp.ne.s32.totalorder %s57, %s71
      %p73 = scmp.eq.s32.totalorder %s26, 0
      %p74 = por %p72, %p73
      %s75 = ssub.s32 %s20, %s27
      %p76 = scmp.eq.s32.totalorder %s75, 0
      %s78 = sadd.s32 %s77, 1
      %s79 = scalar_select %p76, %s77, %s78
      %p82 = pneg %p76
      %p83 = scmp.eq.s32.totalorder %s20, 3
      %p84 = por %p82, %p83
      %p85 = scmp.ne.s32.totalorder %s77, %s80
      %p86 = scmp.eq.s32.totalorder %s20, 0
      %p87 = por %p85, %p86
      %p88 = scmp.ne.s32.totalorder %s77, %s80
      %p89 = scmp.eq.s32.totalorder %s25, 3
      %p90 = por %p88, %p89
      %p91 = scmp.ne.s32.totalorder %s80, %s81
      %p92 = scmp.eq.s32.totalorder %s25, 0
      %p93 = por %p91, %p92
      %p94 = scmp.ne.s32.totalorder %s80, %s81
      %p95 = scmp.eq.s32.totalorder %s26, 3
      %p96 = por %p94, %p95
      %p98 = scmp.ne.s32.totalorder %s81, %s97
      %p99 = scmp.eq.s32.totalorder %s26, 0
      %p100 = por %p98, %p99
      %s101 = ssub.s32 %s20, %s27
      %p102 = scmp.eq.s32.totalorder %s101, 0
      %s104 = sadd.s32 %s103, 1
      %s105 = scalar_select %p102, %s103, %s104
      %p108 = pneg %p102
      %p109 = scmp.eq.s32.totalorder %s20, 3
      %p110 = por %p108, %p109
      %p111 = scmp.ne.s32.totalorder %s103, %s106
      %p112 = scmp.eq.s32.totalorder %s20, 0
      %p113 = por %p111, %p112
      %p114 = scmp.ne.s32.totalorder %s103, %s106
      %p115 = scmp.eq.s32.totalorder %s25, 3
      %p116 = por %p114, %p115
      %p117 = scmp.ne.s32.totalorder %s106, %s107
      %p118 = scmp.eq.s32.totalorder %s25, 0
      %p119 = por %p117, %p118
      %p120 = scmp.ne.s32.totalorder %s106, %s107
      %p121 = scmp.eq.s32.totalorder %s26, 3
      %p122 = por %p120, %p121
      %p124 = scmp.ne.s32.totalorder %s107, %s123
      %p125 = scmp.eq.s32.totalorder %s26, 0
      %p126 = por %p124, %p125
      %p127 = scmp.le.s32.totalorder 1, %s20
      %p128 = scmp.lt.s32.totalorder %s20, 5
      %p129 = pnand %p127, %p128
      %p130 = pneg %p129
      // Predicated region
      $region9: #{tpu_custom_call.1} parent=5 // pred_check
        _
      $region10: #{tpu_custom_call.1} parent=5 // pred_check_branch
        %132 = sbr.rel (%p129) target = $region12
      $region11: #{tpu_custom_call.1} parent=5 // pred_region
        %s133 = ssub.s32 %s20, 1
        // Predicated region
        $region13: #{tpu_custom_call.1} parent=11 // pred_check
          %p134 = pneg %p67
        $region14: #{tpu_custom_call.1} parent=11 // pred_check_branch
          %136 = sbr.rel (%p134) target = $region16
        $region15: #{tpu_custom_call.1} parent=11 // pred_region
          %s138 = ssub.s32 1024, 1024
          %139 = vsyncadd [#allocation6], %s138
          %s140 = sshll.u32 [#allocation5], 4
          %s141 = int_to_ptr.vmem [resolvable:$true] %s140
          %146 = dma.hbm_to_vmem [thread:$0]  %s1, 1024, %s141, [#allocation6], 64, 64, 4
        $region16: #{tpu_custom_call.1} parent=11 // pred_fallthru
          _
      $region12: #{tpu_custom_call.1} parent=5 // pred_fallthru
        _
      %p147 = scmp.lt.s32.totalorder %s20, 4
      // Predicated region
      $region17: #{tpu_custom_call.1} parent=5 // pred_check
        %p148 = pneg %p147
      $region18: #{tpu_custom_call.1} parent=5 // pred_check_branch
        %150 = sbr.rel (%p148) target = $region20
      $region19: #{tpu_custom_call.1} parent=5 // pred_region
        // Predicated region
        $region21: #{tpu_custom_call.1} parent=19 // pred_check
          %p151 = pneg %p40
        $region22: #{tpu_custom_call.1} parent=19 // pred_check_branch
          %153 = sbr.rel (%p151) target = $region24
        $region23: #{tpu_custom_call.1} parent=19 // pred_region
          %s154 = sand.u32 %s30, 1
          %s155 = scalar_lea.sflag [#allocation3], %s154
          %s156 = sand.u32 %s30, 1
          %s157 = smul.addr %s156, 32
          %s158 = scalar_lea.vmem [#allocation2], %s157
          %s159 = smul.u32 8, %s20
          %s161 = ssub.s32 512, 512
          %162 = vsyncadd %s155, %s161
          %s163 = smul.addr %s159, 64
          %s164 = scalar_lea.hbm %s0, %s163
          %s165 = sshll.u32 %s158, 4
          %s166 = int_to_ptr.vmem [resolvable:$true] %s165
          %171 = dma.hbm_to_vmem [thread:$0]  %s164, 512, %s166, %s155, 64, 64, 4
        $region24: #{tpu_custom_call.1} parent=19 // pred_fallthru
          _
      $region20: #{tpu_custom_call.1} parent=5 // pred_fallthru
        _
      %p172 = scmp.le.s32.totalorder 1, %s20
      %p173 = scmp.lt.s32.totalorder %s20, 5
      %p174 = pnand %p172, %p173
      %p175 = pneg %p174
      // Predicated region
      $region25: #{tpu_custom_call.1} parent=5 // pred_check
        _
      $region26: #{tpu_custom_call.1} parent=5 // pred_check_branch
        %177 = sbr.rel (%p174) target = $region28
      $region27: #{tpu_custom_call.1} parent=5 // pred_region
        %s178 = ssub.s32 %s20, 1
        %s179 = sand.u32 %s33, 1
        %s180 = scalar_lea.sflag [#allocation3], %s179
        %s181 = sand.u32 %s33, 1
        %s182 = smul.addr %s181, 32
        %s183 = scalar_lea.vmem [#allocation2], %s182
        // Predicated region
        $region29: #{tpu_custom_call.1} parent=27 // pred_check
          %p184 = pneg %p46
        $region30: #{tpu_custom_call.1} parent=27 // pred_check_branch
          %186 = sbr.rel (%p184) target = $region32
        $region31: #{tpu_custom_call.1} parent=27 // pred_region
          %187 = dma.done %s180, 512
        $region32: #{tpu_custom_call.1} parent=27 // pred_fallthru
          _
        // Predicated region
        $region33: #{tpu_custom_call.1} parent=27 // pred_check
          %p188 = pneg %p67
        $region34: #{tpu_custom_call.1} parent=27 // pred_check_branch
          %190 = sbr.rel (%p188) target = $region36
        $region35: #{tpu_custom_call.1} parent=27 // pred_region
          %191 = dma.done [#allocation6], 1024
        $region36: #{tpu_custom_call.1} parent=27 // pred_fallthru
          _
        %s192 = sand.u32 %s33, 1
        %s193 = scalar_lea.sflag [#allocation3], %s192
        %s194 = sand.u32 %s33, 1
        %s195 = smul.addr %s194, 32
        %s196 = scalar_lea.vmem [#allocation2], %s195
        %p197 = pneg %p46
        %p198 = pneg %p43
        %p199 = pneg %p67
        %p200 = pneg %p64
        %p201 = pneg %p93
        %p202 = pneg %p90
        %s203 = sand.u32 %s80, 1
        %s204 = scalar_lea.sflag [#allocation4], %s203
        %s205 = sand.u32 %s80, 1
        %s206 = scalar_lea.vmem [#allocation7], %s205
        %p207 = pneg %p119
        %p208 = pneg %p116
        %s209 = sand.u32 %s106, 1
        %s210 = scalar_lea.sflag [#allocation9], %s209
        %s211 = sand.u32 %s106, 1
        %s212 = scalar_lea.vmem [#allocation8], %s211
        %s213 = smul.u32 8, %s25
        %v215 = vld [vmem:[%s183] sm:$0xf]
        %v216 = vld [vmem:[%s183 + $0x4] sm:$0xf]
        %v217 = vld [vmem:[%s183 + $0x8] sm:$0xf]
        %v218 = vld [vmem:[%s183 + $0xc] sm:$0xf]
        %v219 = vld [vmem:[%s183 + $0x10] sm:$0xf]
        %v220 = vld [vmem:[%s183 + $0x14] sm:$0xf]
        %v221 = vld [vmem:[%s183 + $0x18] sm:$0xf]
        %v222 = vld [vmem:[%s183 + $0x1c] sm:$0xf]
        %v223 = vld [vmem:[#allocation5] sm:$0xf]
        %v224 = vld [vmem:[#allocation5 + $0x4] sm:$0xf]
        %v225 = vld [vmem:[#allocation5 + $0x8] sm:$0xf]
        %v226 = vld [vmem:[#allocation5 + $0xc] sm:$0xf]
        %v227 = vld [vmem:[#allocation5 + $0x10] sm:$0xf]
        %v228 = vld [vmem:[#allocation5 + $0x14] sm:$0xf]
        %v229 = vld [vmem:[#allocation5 + $0x18] sm:$0xf]
        %v230 = vld [vmem:[#allocation5 + $0x1c] sm:$0xf]
        %v231 = vld [vmem:[#allocation5 + $0x20] sm:$0xf]
        %v232 = vld [vmem:[#allocation5 + $0x24] sm:$0xf]
        %v233 = vld [vmem:[#allocation5 + $0x28] sm:$0xf]
        %v234 = vld [vmem:[#allocation5 + $0x2c] sm:$0xf]
        %v235 = vld [vmem:[#allocation5 + $0x30] sm:$0xf]
        %v236 = vld [vmem:[#allocation5 + $0x34] sm:$0xf]
        %v237 = vld [vmem:[#allocation5 + $0x38] sm:$0xf]
        %v238 = vld [vmem:[#allocation5 + $0x3c] sm:$0xf]
        %v247 = vunpack.c.l.b16 %v215
        %v248 = vunpack.c.l.b16 %v216
        %v249 = vunpack.c.l.b16 %v217
        %v250 = vunpack.c.l.b16 %v218
        %v251 = vunpack.c.l.b16 %v219
        %v252 = vunpack.c.l.b16 %v220
        %v253 = vunpack.c.l.b16 %v221
        %v254 = vunpack.c.l.b16 %v222
        %v255 = vpack.c.b16 %v248, %v247
        %v256 = vpack.c.b16 %v250, %v249
        %v257 = vpack.c.b16 %v252, %v251
        %v258 = vpack.c.b16 %v254, %v253
        %v279 = vunpack.c.l.b16 %v223
        %v280 = vunpack.c.l.b16 %v224
        %v281 = vunpack.c.l.b16 %v225
        %v282 = vunpack.c.l.b16 %v226
        %v283 = vunpack.c.l.b16 %v227
        %v284 = vunpack.c.l.b16 %v228
        %v285 = vunpack.c.l.b16 %v229
        %v286 = vunpack.c.l.b16 %v230
        %v287 = vunpack.c.l.b16 %v231
        %v288 = vunpack.c.l.b16 %v232
        %v289 = vunpack.c.l.b16 %v233
        %v290 = vunpack.c.l.b16 %v234
        %v291 = vunpack.c.l.b16 %v235
        %v292 = vunpack.c.l.b16 %v236
        %v293 = vunpack.c.l.b16 %v237
        %v294 = vunpack.c.l.b16 %v238
        %v295 = vpack.c.b16 %v280, %v279
        %v296 = vpack.c.b16 %v282, %v281
        %v297 = vpack.c.b16 %v284, %v283
        %v298 = vpack.c.b16 %v286, %v285
        %v299 = vpack.c.b16 %v288, %v287
        %v300 = vpack.c.b16 %v290, %v289
        %v301 = vpack.c.b16 %v292, %v291
        %v302 = vpack.c.b16 %v294, %v293
        %311 = vmatprep.subr.bf16.mxu0 0
        %312 = vmatpush1.bf16.msra.mxu0 %v295
        %313 = vmatprep.subr.bf16.mxu0 0
        %314 = vmatpush1.bf16.msra.mxu0 %v296
        %315 = vmatprep.subr.bf16.mxu0 0
        %316 = vmatpush1.bf16.msra.mxu0 %v297
        %317 = vmatprep.subr.bf16.mxu0 0
        %318 = vmatpush1.bf16.msra.mxu0 %v298
        %319 = vmatprep.subr.bf16.mxu0 0
        %320 = vmatpush1.bf16.msra.mxu0 %v299
        %321 = vmatprep.subr.bf16.mxu0 0
        %322 = vmatpush1.bf16.msra.mxu0 %v300
        %323 = vmatprep.subr.bf16.mxu0 0
        %324 = vmatpush1.bf16.msra.mxu0 %v301
        %325 = vmatprep.subr.bf16.mxu0 0
        %326 = vmatpush1.bf16.msra.mxu0 %v302
        %327 = vmatprep.subr.bf16.mxu0 0
        %328 = vmatpush1.bf16.msra.mxu0 0
        %329 = vmatprep.subr.bf16.mxu0 0
        %330 = vmatpush1.bf16.msra.mxu0 0
        %331 = vmatprep.subr.bf16.mxu0 0
        %332 = vmatpush1.bf16.msra.mxu0 0
        %333 = vmatprep.subr.bf16.mxu0 0
        %334 = vmatpush1.bf16.msra.mxu0 0
        %335 = vmatprep.subr.bf16.mxu0 0
        %336 = vmatpush1.bf16.msra.mxu0 0
        %337 = vmatprep.subr.bf16.mxu0 0
        %338 = vmatpush1.bf16.msra.mxu0 0
        %339 = vmatprep.subr.bf16.mxu0 0
        %340 = vmatpush1.bf16.msra.mxu0 0
        %341 = vmatprep.subr.bf16.mxu0 0
        %342 = vmatpush1.bf16.msra.mxu0 0
        %343 = vmatprep.mubr.bf16.mxu0 0
        %344 = vmatmul.mubr.bf16.gmra.mrb[0].mxu0 %v255
        %v345 = vpop.f32.mrb[0].mxu0
        %v346 = vadd.f32 0.0, %v345
        %v347 = vpop.f32.mrb[0].mxu0
        %v348 = vpop.f32.mrb[0].mxu0
        %v349 = vadd.f32 0.0, %v348
        %v350 = vpop.f32.mrb[0].mxu0
        %351 = vmatprep.mubr.bf16.mxu0 0
        %352 = vmatmul.mubr.bf16.gmra.mrb[0].mxu0 %v256
        %v353 = vpop.f32.mrb[0].mxu0
        %v354 = vadd.f32 0.0, %v353
        %v355 = vpop.f32.mrb[0].mxu0
        %v356 = vpop.f32.mrb[0].mxu0
        %v357 = vadd.f32 0.0, %v356
        %v358 = vpop.f32.mrb[0].mxu0
        %359 = vmatprep.mubr.bf16.mxu0 0
        %360 = vmatmul.mubr.bf16.gmra.mrb[0].mxu0 %v257
        %v361 = vpop.f32.mrb[0].mxu0
        %v362 = vadd.f32 0.0, %v361
        %v363 = vpop.f32.mrb[0].mxu0
        %v364 = vpop.f32.mrb[0].mxu0
        %v365 = vadd.f32 0.0, %v364
        %v366 = vpop.f32.mrb[0].mxu0
        %367 = vmatprep.mubr.bf16.mxu0 0
        %368 = vmatmul.mubr.bf16.gmra.mrb[0].mxu0 %v258
        %v369 = vpop.f32.mrb[0].mxu0
        %v370 = vadd.f32 0.0, %v369
        %v371 = vpop.f32.mrb[0].mxu0
        %v372 = vpop.f32.mrb[0].mxu0
        %v373 = vadd.f32 0.0, %v372
        %v374 = vpop.f32.mrb[0].mxu0
        %375 = vdwg.mxu0
        %v376 = vadd.f32 %v346, %v349
        %v377 = vadd.f32 %v376, %v354
        %v378 = vadd.f32 %v377, %v357
        %v379 = vadd.f32 %v378, %v362
        %v380 = vadd.f32 %v379, %v365
        %v381 = vadd.f32 %v380, %v370
        %v382 = vadd.f32 %v381, %v373
        %v383 = vrot.slane %v382, 4
        %v384 = vadd.f32 %v382, %v383
        %v385 = vrot.slane %v384, 2
        %v386 = vadd.f32 %v384, %v385
        %v387 = vrot.slane %v386, 1
        %v388 = vadd.f32 %v386, %v387
        %389 = vst [vmem:[%s206] sm:$0x1] %v388
        %v390 = vmul.f32 %v346, %v346
        %v391 = vmul.f32 %v349, %v349
        %v392 = vmul.f32 %v354, %v354
        %v393 = vmul.f32 %v357, %v357
        %v394 = vmul.f32 %v362, %v362
        %v395 = vmul.f32 %v365, %v365
        %v396 = vmul.f32 %v370, %v370
        %v397 = vmul.f32 %v373, %v373
        %v398 = vadd.f32 %v390, %v391
        %v399 = vadd.f32 %v398, %v392
        %v400 = vadd.f32 %v399, %v393
        %v401 = vadd.f32 %v400, %v394
        %v402 = vadd.f32 %v401, %v395
        %v403 = vadd.f32 %v402, %v396
        %v404 = vadd.f32 %v403, %v397
        %v405 = vrot.slane %v404, 4
        %v406 = vadd.f32 %v404, %v405
        %v407 = vrot.slane %v406, 2
        %v408 = vadd.f32 %v406, %v407
        %v409 = vrot.slane %v408, 1
        %v410 = vadd.f32 %v408, %v409
        %411 = vst [vmem:[%s212] sm:$0x1] %v410
        %s412 = sand.u32 %s80, 1
        %s413 = scalar_lea.sflag [#allocation4], %s412
        %s414 = sand.u32 %s80, 1
        %s415 = scalar_lea.vmem [#allocation7], %s414
        %s416 = sand.u32 %s106, 1
        %s417 = scalar_lea.sflag [#allocation9], %s416
        %s418 = sand.u32 %s106, 1
        %s419 = scalar_lea.vmem [#allocation8], %s418
        // Predicated region
        $region37: #{tpu_custom_call.1} parent=27 // pred_check
          %p420 = pneg %p90
        $region38: #{tpu_custom_call.1} parent=27 // pred_check_branch
          %422 = sbr.rel (%p420) target = $region40
        $region39: #{tpu_custom_call.1} parent=27 // pred_region
          %s424 = ssub.s32 16, 16
          %425 = vsyncadd %s413, %s424
          %s426 = smul.addr %s25, 16
          %s427 = scalar_lea.hbm %s2, %s426
          %s429 = sshll.u32 %s415, 4
          %s430 = int_to_ptr.vmem [resolvable:$true] %s429
          %432 = dma.vmem_to_hbm [thread:$0]  %s430, 16, %s427, %s413
        $region40: #{tpu_custom_call.1} parent=27 // pred_fallthru
          _
        // Predicated region
        $region41: #{tpu_custom_call.1} parent=27 // pred_check
          %p433 = pneg %p116
        $region42: #{tpu_custom_call.1} parent=27 // pred_check_branch
          %435 = sbr.rel (%p433) target = $region44
        $region43: #{tpu_custom_call.1} parent=27 // pred_region
          %s437 = ssub.s32 16, 16
          %438 = vsyncadd %s417, %s437
          %s439 = smul.addr %s25, 16
          %s440 = scalar_lea.hbm %s3, %s439
          %s442 = sshll.u32 %s419, 4
          %s443 = int_to_ptr.vmem [resolvable:$true] %s442
          %445 = dma.vmem_to_hbm [thread:$0]  %s443, 16, %s440, %s417
        $region44: #{tpu_custom_call.1} parent=27 // pred_fallthru
          _
      $region28: #{tpu_custom_call.1} parent=5 // pred_fallthru
        _
      %p446 = scmp.le.s32.totalorder 2, %s20
      // Predicated region
      $region45: #{tpu_custom_call.1} parent=5 // pred_check
        %p447 = pneg %p446
      $region46: #{tpu_custom_call.1} parent=5 // pred_check_branch
        %449 = sbr.rel (%p447) target = $region48
      $region47: #{tpu_custom_call.1} parent=5 // pred_region
        %s450 = ssub.s32 %s20, 2
        // Predicated region
        $region49: #{tpu_custom_call.1} parent=47 // pred_check
          %p451 = pneg %p96
        $region50: #{tpu_custom_call.1} parent=47 // pred_check_branch
          %453 = sbr.rel (%p451) target = $region52
        $region51: #{tpu_custom_call.1} parent=47 // pred_region
          %s454 = sand.u32 %s81, 1
          %s455 = scalar_lea.sflag [#allocation4], %s454
          %s456 = sand.u32 %s81, 1
          %s457 = scalar_lea.vmem [#allocation7], %s456
          %458 = dma.done %s455, 16
        $region52: #{tpu_custom_call.1} parent=47 // pred_fallthru
          _
        // Predicated region
        $region53: #{tpu_custom_call.1} parent=47 // pred_check
          %p459 = pneg %p122
        $region54: #{tpu_custom_call.1} parent=47 // pred_check_branch
          %461 = sbr.rel (%p459) target = $region56
        $region55: #{tpu_custom_call.1} parent=47 // pred_region
          %s462 = sand.u32 %s107, 1
          %s463 = scalar_lea.sflag [#allocation9], %s462
          %s464 = sand.u32 %s107, 1
          %s465 = scalar_lea.vmem [#allocation8], %s464
          %466 = dma.done %s463, 16
        $region56: #{tpu_custom_call.1} parent=47 // pred_fallthru
          _
      $region48: #{tpu_custom_call.1} parent=5 // pred_fallthru
        _
    $region6: #{tpu_custom_call.1} parent=1 // loop_footer
      %s24 = sadd.s32 1, %s20
    $region7: #{tpu_custom_call.1} parent=1 // loop_footer_branch
      %19 = sbr.rel target = $region3
    $region8: #{tpu_custom_call.1} parent=1 // loop_exit
      _
    %467 = vsyncpa [#allocation3], 1
    %s468 = scalar_lea.sflag [#allocation3], 1
    %469 = vsyncpa %s468, 1
    %470 = vsyncpa [#allocation6], 1
    %471 = vsyncpa [#allocation4], 1
    %s472 = scalar_lea.sflag [#allocation4], 1
    %473 = vsyncpa %s472, 1
    %474 = vsyncpa [#allocation9], 1
    %s475 = scalar_lea.sflag [#allocation9], 1
    %476 = vsyncpa %s475, 1

</llo_original>
